<compile_context>
chip_gen: v5e
topology: v5e:2x2
jax: 0.10.0
libtpu: 0.0.40
codegen_flags: <defaults>
</compile_context>

<pallas_src>
import functools

import jax
import jax.numpy as jnp
from jax.experimental import pallas as pl
from jax.experimental.pallas import tpu as pltpu

DIM = 512                    # module-level constant in aelego.py
C_OUT = 4                    # synthetic decoder output channels
K = 4                        # synthetic decoder conv-transpose kernel size
Y_FEATS = C_OUT * K * K      # 64 flat decoder output features
PACK_W = 128                 # lane-dense packed output width (one full lane tile)


def _vmem_spec():
    # Whole array resident in VMEM, no blocking / pipelining machinery.
    return pl.BlockSpec(memory_space=pltpu.MemorySpace.VMEM)


def zdecoder_kernel(zc_ref, w1_ref, wd_ref, bd_ref, out_ref, *, use_context):
    """Fused ZDecoder forward writing one lane-dense (B, 128) packed output.

    packed[:, :64]               = decoder output (tanh), flat over (C_OUT, K, K)
    packed[:, 64:64+latent_dim]  = c (context-projected latent)        [context path]
    packed[:, remaining]         = zero

    zc_ref : (B, K1)      input with trailing ones column (affine / bias trick)
    w1_ref : (K1, 640|512) fused first-stage weights (+ bias row)
    wd_ref : (DIM, 128)   decoder weight, zero-padded lanes 64:128
    bd_ref : (1, 128)     decoder bias,   zero-padded lanes 64:128
    """
    # Single first-stage dot: columns 0:512 -> pre-ReLU h, columns 512:640 -> c
    # (biases already folded in via the ones column of zc).
    t = jnp.dot(zc_ref[...], w1_ref[...], preferred_element_type=jnp.float32)

    if use_context:
        h = jnp.maximum(t[:, :DIM], 0.0)        # (B, 512)   lane-aligned slice
        c_blk = t[:, DIM:]                      # (B, 128)   c in lanes 64:96
    else:
        h = jnp.maximum(t, 0.0)                 # (B, 512)

    # Decoder dot straight into the packed 128-lane layout; padded lanes give
    # tanh(0) = 0, so overlaying c is a single full-width VPU add.
    y = jnp.tanh(jnp.dot(h, wd_ref[...], preferred_element_type=jnp.float32)
                 + bd_ref[...])                 # (B, 128)

    out_ref[...] = (y + c_blk) if use_context else y   # one unmasked 128-lane store


def init_params(latent_dim, semantic_dim, key):
    """Deterministic synthetic parameters (shapes match the PyTorch module)."""
    assert Y_FEATS + latent_dim <= PACK_W, "packed output slab too narrow"
    ks = jax.random.split(key, 6)
    in_ctx = semantic_dim + latent_dim
    # nn.Linear weight (out, in) stored transposed as (in, out) for x @ W.
    wc = jax.random.normal(ks[0], (in_ctx, latent_dim), jnp.float32) / jnp.sqrt(in_ctx)
    bc = jax.random.normal(ks[1], (1, latent_dim), jnp.float32) * 0.01
    wo = jax.random.normal(ks[2], (latent_dim, DIM), jnp.float32) / jnp.sqrt(latent_dim)
    bo = jax.random.normal(ks[3], (1, DIM), jnp.float32) * 0.01
    # ConvTranspose2d weight (in=DIM, out=C_OUT, K, K) flattened over (out, kH, kW).
    # TODO(synk): verify this flat ordering against the real injected decoder's layout.
    wd4 = jax.random.normal(ks[4], (DIM, C_OUT, K, K), jnp.float32) / jnp.sqrt(DIM)
    wd = wd4.reshape(DIM, Y_FEATS)
    bd_c = jax.random.normal(ks[5], (C_OUT,), jnp.float32) * 0.01    # per-channel bias
    bd = jnp.broadcast_to(bd_c[:, None, None], (C_OUT, K, K)).reshape(1, Y_FEATS)

    # ---- kernel-ready padded / fused operands (built once here, free at runtime) ----
    # Decoder weight/bias padded to a full 128-lane tile -> unmasked output store.
    wd_pad = jnp.zeros((DIM, PACK_W), jnp.float32).at[:, :Y_FEATS].set(wd)
    bd_pad = jnp.zeros((1, PACK_W), jnp.float32).at[:, :Y_FEATS].set(bd)

    # Context path:
    #   h = ReLU((zc@wc + bc)@wo + bo) == ReLU(zc@(wc@wo) + (bc@wo + bo))   (fold)
    #   c placed in lanes 64:96 via zero-padded columns, both dots sharing LHS zc,
    #   all biases folded into a trailing row (zc carries a ones column).
    w_fold = wc @ wo                                            # (in_ctx, DIM)
    b_fold = bc @ wo + bo                                       # (1, DIM)
    wc_pad = jnp.zeros((in_ctx, PACK_W), jnp.float32).at[
        :, Y_FEATS:Y_FEATS + latent_dim].set(wc)
    bc_pad = jnp.zeros((1, PACK_W), jnp.float32).at[
        :, Y_FEATS:Y_FEATS + latent_dim].set(bc)
    w1_ctx = jnp.concatenate(
        [jnp.concatenate([w_fold, wc_pad], axis=1),             # (in_ctx, 640)
         jnp.concatenate([b_fold, bc_pad], axis=1)], axis=0)    # (in_ctx+1, 640)

    # No-context path: Condition uses wo/bo directly and c == z (returned by wrapper).
    w1_noctx = jnp.concatenate([wo, bo], axis=0)                # (latent_dim+1, 512)

    return {"wc": wc, "bc": bc, "wo": wo, "bo": bo, "wd": wd, "bd": bd,
            "w1_ctx": w1_ctx, "w1_noctx": w1_noctx,
            "wd_pad": wd_pad, "bd_pad": bd_pad,
            "latent_dim": latent_dim, "semantic_dim": semantic_dim}


def zdecoder_forward(params, z, context=None):
    """JAX wrapper: concat (glue) -> fused Pallas kernel -> slice + NCHW reshape (glue)."""
    use_context = (params["semantic_dim"] > 0) and (context is not None)
    B = z.shape[0]
    latent_dim = params["latent_dim"]

    ones = jnp.ones((B, 1), jnp.float32)
    if use_context:
        zc_aug = jnp.concatenate([z, context, ones], axis=1)    # (B, in_ctx+1)
        w1 = params["w1_ctx"]
    else:
        zc_aug = jnp.concatenate([z, ones], axis=1)             # (B, latent_dim+1)
        w1 = params["w1_noctx"]

    k1, n1 = w1.shape
    cost = pl.CostEstimate(
        flops=2 * B * (k1 * n1 + DIM * PACK_W),
        transcendentals=B * PACK_W,
        bytes_accessed=4 * int(zc_aug.size + w1.size + params["wd_pad"].size
                               + params["bd_pad"].size + B * PACK_W),
    )

    kernel = functools.partial(zdecoder_kernel, use_context=use_context)
    packed = pl.pallas_call(
        kernel,
        in_specs=[_vmem_spec()] * 4,
        out_specs=_vmem_spec(),
        out_shape=jax.ShapeDtypeStruct((B, PACK_W), jnp.float32),
        cost_estimate=cost,
    )(zc_aug, w1, params["wd_pad"], params["bd_pad"])

    # h.view(B, DIM, 1, 1) -> decoder -> NCHW output
    y = packed[:, :Y_FEATS].reshape(B, C_OUT, K, K)
    c = packed[:, Y_FEATS:Y_FEATS + latent_dim] if use_context else z
    return y, c


def zdecoder_reference(params, z, context=None):
    """Pure-JAX reference (original un-folded two-matmul formulation)."""
    use_context = (params["semantic_dim"] > 0) and (context is not None)
    zc = jnp.concatenate([z, context], axis=1) if use_context else z
    c = zc @ params["wc"] + params["bc"] if use_context else zc
    h = jnp.maximum(c @ params["wo"] + params["bo"], 0.0)
    y = jnp.tanh(h @ params["wd"] + params["bd"])
    return y.reshape(z.shape[0], C_OUT, K, K), c


if __name__ == "__main__":
    B, LATENT, SEM = 8, 32, 16
    key = jax.random.PRNGKey(0)
    kz, kc, kp = jax.random.split(key, 3)

    params = init_params(LATENT, SEM, kp)
    z = jax.random.normal(kz, (B, LATENT), jnp.float32)
    context = jax.random.normal(kc, (B, SEM), jnp.float32)

    # Context path
    y, c = jax.block_until_ready(zdecoder_forward(params, z, context))
    y_ref, c_ref = zdecoder_reference(params, z, context)
    assert y.shape == (B, C_OUT, K, K) and c.shape == (B, LATENT)
    assert jnp.allclose(y, y_ref, atol=1e-5, rtol=1e-5)
    assert jnp.allclose(c, c_ref, atol=1e-5, rtol=1e-5)

    # No-context path (Condition returns c == z; only wo/bo enter the fused weight)
    y2, c2 = jax.block_until_ready(zdecoder_forward(params, z, None))
    y2_ref, c2_ref = zdecoder_reference(params, z, None)
    assert jnp.allclose(y2, y2_ref, atol=1e-5, rtol=1e-5)
    assert jnp.allclose(c2, z, atol=1e-6)

    print("KERNEL_OK")
</pallas_src>

<mosaic_0001>
module attributes {stable_mosaic.version = 11 : i64} {
  func.func @zdecoder_kernel(%arg0: memref<8x49xf32, #tpu.memory_space<vmem>>, %arg1: memref<49x640xf32, #tpu.memory_space<vmem>>, %arg2: memref<512x128xf32, #tpu.memory_space<vmem>>, %arg3: memref<1x128xf32, #tpu.memory_space<vmem>>, %arg4: memref<8x128xf32, #tpu.memory_space<vmem>>) attributes {dimension_semantics = [], scalar_prefetch = 0 : i64, scratch_operands = 0 : i64, tpu.core_type = #tpu.core_type<tc>} {
    %c0 = arith.constant 0 : index
    %c0_0 = arith.constant 0 : index
    %0 = vector.load %arg0[%c0, %c0_0] : memref<8x49xf32, #tpu.memory_space<vmem>>, vector<8x49xf32>
    %c0_1 = arith.constant 0 : index
    %c0_2 = arith.constant 0 : index
    %1 = vector.load %arg1[%c0_1, %c0_2] : memref<49x640xf32, #tpu.memory_space<vmem>>, vector<49x640xf32>
    %cst = arith.constant dense<0.000000e+00> : vector<8x640xf32>
    %2 = tpu.matmul %0, %1, %cst {dimension_numbers = #tpu.dot_dimension_numbers<[1], [0], [0], [1], [0, 0, 1, 1], [], []>} : vector<8x49xf32>, vector<49x640xf32>, vector<8x640xf32> -> vector<8x640xf32>
    %3 = vector.extract_strided_slice %2 {offsets = [0, 0], sizes = [8, 512], strides = [1, 1]} : vector<8x640xf32> to vector<8x512xf32>
    %cst_3 = arith.constant 0.000000e+00 : f32
    %4 = vector.broadcast %cst_3 : f32 to vector<8x512xf32>
    %5 = arith.maximumf %3, %4 : vector<8x512xf32>
    %6 = vector.extract_strided_slice %2 {offsets = [0, 512], sizes = [8, 128], strides = [1, 1]} : vector<8x640xf32> to vector<8x128xf32>
    %c0_4 = arith.constant 0 : index
    %c0_5 = arith.constant 0 : index
    %7 = vector.load %arg2[%c0_4, %c0_5] : memref<512x128xf32, #tpu.memory_space<vmem>>, vector<512x128xf32>
    %cst_6 = arith.constant dense<0.000000e+00> : vector<8x128xf32>
    %8 = tpu.matmul %5, %7, %cst_6 {dimension_numbers = #tpu.dot_dimension_numbers<[1], [0], [0], [1], [0, 0, 1, 1], [], []>} : vector<8x512xf32>, vector<512x128xf32>, vector<8x128xf32> -> vector<8x128xf32>
    %c0_7 = arith.constant 0 : index
    %c0_8 = arith.constant 0 : index
    %9 = vector.load %arg3[%c0_7, %c0_8] : memref<1x128xf32, #tpu.memory_space<vmem>>, vector<1x128xf32>
    %10 = vector.broadcast %9 : vector<1x128xf32> to vector<8x128xf32>
    %11 = arith.addf %8, %10 : vector<8x128xf32>
    %12 = math.tanh %11 : vector<8x128xf32>
    %13 = arith.addf %12, %6 : vector<8x128xf32>
    %c0_9 = arith.constant 0 : index
    %c0_10 = arith.constant 0 : index
    %14 = vector.load %arg4[%c0_9, %c0_10] : memref<8x128xf32, #tpu.memory_space<vmem>>, vector<8x128xf32>
    tpu.vector_store %arg4[%c0_9, %c0_10], %13 {strides = array<i32>} : memref<8x128xf32, #tpu.memory_space<vmem>>, vector<8x128xf32>,
    return
  }
}

</mosaic_0001>

<llo_original>
// kernel: tpu_custom_call.1
$region0: #{tpu_custom_call.1}
  #allocation0 [shape = 'u32[]', space=smem, size = 0x4, offset = 0x4, fixed_abs, tag = 'smem constant byte address 0x4 - core index']
  #allocation1 [shape = 'u32[72,128]{1,0:T(1,128)}', space=vmem, size = 0x9000, scoped, tag = 'internal scratch']
  %s0 = inlined_call_operand.hbm [shape: f32[8,49], index: 0, kind: input, shape index: {}]
  %s1 = inlined_call_operand.hbm [shape: f32[49,640], index: 1, kind: input, shape index: {}]
  %s2 = inlined_call_operand.hbm [shape: f32[512,128], index: 2, kind: input, shape index: {}]
  %s3 = inlined_call_operand.vmem [shape: f32[1,128], index: 3, kind: input, shape index: {}]
  %s4 = inlined_call_operand.hbm [shape: f32[8,128], index: 4, kind: output, shape index: {}]
  %s5 = sld [smem:[#allocation0]]
  $region38: #{tpu_custom_call.1} parent=0
    _
  %s7 = ssub.s32 1, %s5
  %s8 = scalar_select 0, %s7, %s5
  $region1: #{tpu_custom_call.1} parent=0
    #allocation2 [shape = 'u8[4096]{0}', space=vmem, size = 0x1000, scoped, tag = 'input window, operand 0, single buffered']
    #allocation3 [shape = 's32[1]{0}', space=sflag, size = 0x4, scoped, tag = 'scoped memory for tpu_custom_call.1']
    #allocation4 [shape = 's32[1]{0}', space=sflag, size = 0x4, scoped, tag = 'scoped memory for tpu_custom_call.1']
    #allocation5 [shape = 'u8[143360]{0}', space=vmem, size = 0x23000, scoped, tag = 'input window, operand 1, single buffered']
    #allocation6 [shape = 's32[1]{0}', space=sflag, size = 0x4, scoped, tag = 'scoped memory for tpu_custom_call.1']
    #allocation7 [shape = 'u8[262144]{0}', space=vmem, size = 0x40000, scoped, tag = 'input window, operand 2, single buffered']
    #allocation8 [shape = 'u8[4096]{0}', space=vmem, size = 0x1000, scoped, tag = 'output window, operand 0, single buffered']
    %9 = vsyncpa [#allocation3], 0
    %10 = vsyncpa [#allocation6], 0
    %11 = vsyncpa [#allocation4], 0
    // Predicated region
    $region2: #{tpu_custom_call.1} parent=1 // pred_check
      _
    $region3: #{tpu_custom_call.1} parent=1 // pred_check_branch
      %13 = sbr.rel (0) target = $region5
    $region4: #{tpu_custom_call.1} parent=1 // pred_region
      %15 = vsyncadd [#allocation3], 0
      %s17 = sshll.u32 %s0, 4
      %s18 = int_to_ptr.hbm [resolvable:$true] %s17
      %s19 = sshll.u32 [#allocation2], 4
      %s20 = int_to_ptr.vmem [resolvable:$true] %s19
      %22 = dma.hbm_to_vmem [thread:$0]  %s18, 128, %s20, [#allocation3]
    $region5: #{tpu_custom_call.1} parent=1 // pred_fallthru
      _
    // Predicated region
    $region6: #{tpu_custom_call.1} parent=1 // pred_check
      _
    $region7: #{tpu_custom_call.1} parent=1 // pred_check_branch
      %24 = sbr.rel (0) target = $region9
    $region8: #{tpu_custom_call.1} parent=1 // pred_region
      %26 = vsyncadd [#allocation6], 0
      %s27 = sshll.u32 %s1, 4
      %s28 = int_to_ptr.hbm [resolvable:$true] %s27
      %s29 = sshll.u32 [#allocation5], 4
      %s30 = int_to_ptr.vmem [resolvable:$true] %s29
      %35 = dma.hbm_to_vmem [thread:$0]  %s28, 4480, %s30, [#allocation6], 640, 640, 40
    $region9: #{tpu_custom_call.1} parent=1 // pred_fallthru
      _
    // Predicated region
    $region10: #{tpu_custom_call.1} parent=1 // pred_check
      _
    $region11: #{tpu_custom_call.1} parent=1 // pred_check_branch
      %37 = sbr.rel (0) target = $region13
    $region12: #{tpu_custom_call.1} parent=1 // pred_region
      %39 = vsyncadd [#allocation6], 0
      %s40 = sshll.u32 %s2, 4
      %s41 = int_to_ptr.hbm [resolvable:$true] %s40
      %s42 = sshll.u32 [#allocation7], 4
      %s43 = int_to_ptr.vmem [resolvable:$true] %s42
      %48 = dma.hbm_to_vmem [thread:$0]  %s41, 8192, %s43, [#allocation6], 128, 128, 8
    $region13: #{tpu_custom_call.1} parent=1 // pred_fallthru
      _
    // Predicated region
    $region14: #{tpu_custom_call.1} parent=1 // pred_check
      _
    $region15: #{tpu_custom_call.1} parent=1 // pred_check_branch
      %50 = sbr.rel (0) target = $region17
    $region16: #{tpu_custom_call.1} parent=1 // pred_region
      _
    $region17: #{tpu_custom_call.1} parent=1 // pred_fallthru
      _
    // Predicated region
    $region18: #{tpu_custom_call.1} parent=1 // pred_check
      _
    $region19: #{tpu_custom_call.1} parent=1 // pred_check_branch
      %52 = sbr.rel (0) target = $region21
    $region20: #{tpu_custom_call.1} parent=1 // pred_region
      %54 = dma.done [#allocation3], 128
    $region21: #{tpu_custom_call.1} parent=1 // pred_fallthru
      _
    // Predicated region
    $region22: #{tpu_custom_call.1} parent=1 // pred_check
      _
    $region23: #{tpu_custom_call.1} parent=1 // pred_check_branch
      %56 = sbr.rel (0) target = $region25
    $region24: #{tpu_custom_call.1} parent=1 // pred_region
      %58 = dma.done [#allocation6], 4480
    $region25: #{tpu_custom_call.1} parent=1 // pred_fallthru
      _
    // Predicated region
    $region26: #{tpu_custom_call.1} parent=1 // pred_check
      _
    $region27: #{tpu_custom_call.1} parent=1 // pred_check_branch
      %60 = sbr.rel (0) target = $region29
    $region28: #{tpu_custom_call.1} parent=1 // pred_region
      %62 = dma.done [#allocation6], 8192
    $region29: #{tpu_custom_call.1} parent=1 // pred_fallthru
      _
    %v63 = vld [vmem:[#allocation2] sm:$0xff]
    %v64 = vld [vmem:[#allocation5] sm:$0xff]
    %v65 = vld [vmem:[#allocation5 + $0x8] sm:$0xff]
    %v66 = vld [vmem:[#allocation5 + $0x10] sm:$0xff]
    %v67 = vld [vmem:[#allocation5 + $0x18] sm:$0xff]
    %v68 = vld [vmem:[#allocation5 + $0x20] sm:$0xff]
    %v69 = vld [vmem:[#allocation5 + $0x28] sm:$0xff]
    %v70 = vld [vmem:[#allocation5 + $0x30] sm:$0xff]
    %v71 = vld [vmem:[#allocation5 + $0x38] sm:$0xff]
    %v72 = vld [vmem:[#allocation5 + $0x40] sm:$0xff]
    %v73 = vld [vmem:[#allocation5 + $0x48] sm:$0xff]
    %v74 = vld [vmem:[#allocation5 + $0x50] sm:$0xff]
    %v75 = vld [vmem:[#allocation5 + $0x58] sm:$0xff]
    %v76 = vld [vmem:[#allocation5 + $0x60] sm:$0xff]
    %v77 = vld [vmem:[#allocation5 + $0x68] sm:$0xff]
    %v78 = vld [vmem:[#allocation5 + $0x70] sm:$0xff]
    %v79 = vld [vmem:[#allocation5 + $0x78] sm:$0xff]
    %v80 = vld [vmem:[#allocation5 + $0x80] sm:$0xff]
    %v81 = vld [vmem:[#allocation5 + $0x88] sm:$0xff]
    %v82 = vld [vmem:[#allocation5 + $0x90] sm:$0xff]
    %v83 = vld [vmem:[#allocation5 + $0x98] sm:$0xff]
    %v84 = vld [vmem:[#allocation5 + $0xa0] sm:$0xff]
    %v85 = vld [vmem:[#allocation5 + $0xa8] sm:$0xff]
    %v86 = vld [vmem:[#allocation5 + $0xb0] sm:$0xff]
    %v87 = vld [vmem:[#allocation5 + $0xb8] sm:$0xff]
    %v88 = vld [vmem:[#allocation5 + $0xc0] sm:$0xff]
    %v89 = vld [vmem:[#allocation5 + $0xc8] sm:$0xff]
    %v90 = vld [vmem:[#allocation5 + $0xd0] sm:$0xff]
    %v91 = vld [vmem:[#allocation5 + $0xd8] sm:$0xff]
    %v92 = vld [vmem:[#allocation5 + $0xe0] sm:$0xff]
    %v93 = vld [vmem:[#allocation5 + $0xe8] sm:$0xff]
    %v94 = vld [vmem:[#allocation5 + $0xf0] sm:$0x1]
    %v95 = vld [vmem:[#allocation5 + $0xf8] sm:$0x1]
    %v96 = vld [vmem:[#allocation5 + $0x100] sm:$0x1]
    %v97 = vld [vmem:[#allocation5 + $0x108] sm:$0x1]
    %v98 = vld [vmem:[#allocation5 + $0x110] sm:$0x1]
    %vm99 = vcmask 400384
    %v101 = vsel %vm99, %v63, 0
    %vm103 = vcmask 1040384
    %v105 = vsel %vm103, %v94, 0
    %v108 = vsel %vm103, %v95, 0
    %v111 = vsel %vm103, %v96, 0
    %v114 = vsel %vm103, %v97, 0
    %v117 = vsel %vm103, %v98, 0
    %119 = vmatpush.msra.mxu0 0.0
    %120 = vmatpush.msra.mxu0 0.0
    %121 = vmatpush.msra.mxu0 0.0
    %122 = vmatpush.msra.mxu0 0.0
    %123 = vmatpush.msra.mxu0 0.0
    %124 = vmatpush.msra.mxu0 0.0
    %125 = vmatpush.msra.mxu0 0.0
    %126 = vmatpush.msra.mxu0 0.0
    %127 = vmatpush.msra.mxu0 0.0
    %128 = vmatpush.msra.mxu0 %v105
    %129 = vmatpush.msra.mxu0 %v89
    %130 = vmatpush.msra.mxu0 %v84
    %131 = vmatpush.msra.mxu0 %v79
    %132 = vmatpush.msra.mxu0 %v74
    %133 = vmatpush.msra.mxu0 %v69
    %134 = vmatpush.msra.mxu0 %v64
    %135 = vmatmul.f32.gmra.mxu0 %v101
    %v136 = vpop.f32.mrf.mxu0
    %v137 = vadd.f32 0.0, %v136
    %138 = vdwg.mxu0
    %139 = vmatpush.msra.mxu0 0.0
    %140 = vmatpush.msra.mxu0 0.0
    %141 = vmatpush.msra.mxu0 0.0
    %142 = vmatpush.msra.mxu0 0.0
    %143 = vmatpush.msra.mxu0 0.0
    %144 = vmatpush.msra.mxu0 0.0
    %145 = vmatpush.msra.mxu0 0.0
    %146 = vmatpush.msra.mxu0 0.0
    %147 = vmatpush.msra.mxu0 0.0
    %148 = vmatpush.msra.mxu0 %v108
    %149 = vmatpush.msra.mxu0 %v90
    %150 = vmatpush.msra.mxu0 %v85
    %151 = vmatpush.msra.mxu0 %v80
    %152 = vmatpush.msra.mxu0 %v75
    %153 = vmatpush.msra.mxu0 %v70
    %154 = vmatpush.msra.mxu0 %v65
    %155 = vmatmul.f32.gmra.mxu0 %v101
    %v156 = vpop.f32.mrf.mxu0
    %v157 = vadd.f32 0.0, %v156
    %158 = vdwg.mxu0
    %159 = vmatpush.msra.mxu0 0.0
    %160 = vmatpush.msra.mxu0 0.0
    %161 = vmatpush.msra.mxu0 0.0
    %162 = vmatpush.msra.mxu0 0.0
    %163 = vmatpush.msra.mxu0 0.0
    %164 = vmatpush.msra.mxu0 0.0
    %165 = vmatpush.msra.mxu0 0.0
    %166 = vmatpush.msra.mxu0 0.0
    %167 = vmatpush.msra.mxu0 0.0
    %168 = vmatpush.msra.mxu0 %v111
    %169 = vmatpush.msra.mxu0 %v91
    %170 = vmatpush.msra.mxu0 %v86
    %171 = vmatpush.msra.mxu0 %v81
    %172 = vmatpush.msra.mxu0 %v76
    %173 = vmatpush.msra.mxu0 %v71
    %174 = vmatpush.msra.mxu0 %v66
    %175 = vmatmul.f32.gmra.mxu0 %v101
    %v176 = vpop.f32.mrf.mxu0
    %v177 = vadd.f32 0.0, %v176
    %178 = vdwg.mxu0
    %179 = vmatpush.msra.mxu0 0.0
    %180 = vmatpush.msra.mxu0 0.0
    %181 = vmatpush.msra.mxu0 0.0
    %182 = vmatpush.msra.mxu0 0.0
    %183 = vmatpush.msra.mxu0 0.0
    %184 = vmatpush.msra.mxu0 0.0
    %185 = vmatpush.msra.mxu0 0.0
    %186 = vmatpush.msra.mxu0 0.0
    %187 = vmatpush.msra.mxu0 0.0
    %188 = vmatpush.msra.mxu0 %v114
    %189 = vmatpush.msra.mxu0 %v92
    %190 = vmatpush.msra.mxu0 %v87
    %191 = vmatpush.msra.mxu0 %v82
    %192 = vmatpush.msra.mxu0 %v77
    %193 = vmatpush.msra.mxu0 %v72
    %194 = vmatpush.msra.mxu0 %v67
    %195 = vmatmul.f32.gmra.mxu0 %v101
    %v196 = vpop.f32.mrf.mxu0
    %v197 = vadd.f32 0.0, %v196
    %198 = vdwg.mxu0
    %199 = vmatpush.msra.mxu0 0.0
    %200 = vmatpush.msra.mxu0 0.0
    %201 = vmatpush.msra.mxu0 0.0
    %202 = vmatpush.msra.mxu0 0.0
    %203 = vmatpush.msra.mxu0 0.0
    %204 = vmatpush.msra.mxu0 0.0
    %205 = vmatpush.msra.mxu0 0.0
    %206 = vmatpush.msra.mxu0 0.0
    %207 = vmatpush.msra.mxu0 0.0
    %208 = vmatpush.msra.mxu0 %v117
    %209 = vmatpush.msra.mxu0 %v93
    %210 = vmatpush.msra.mxu0 %v88
    %211 = vmatpush.msra.mxu0 %v83
    %212 = vmatpush.msra.mxu0 %v78
    %213 = vmatpush.msra.mxu0 %v73
    %214 = vmatpush.msra.mxu0 %v68
    %215 = vmatmul.f32.gmra.mxu0 %v101
    %v216 = vpop.f32.mrf.mxu0
    %v217 = vadd.f32 0.0, %v216
    %218 = vdwg.mxu0
    %v219 = vmax.f32 %v137, 0.0
    %v220 = vmax.f32 %v157, 0.0
    %v221 = vmax.f32 %v177, 0.0
    %v222 = vmax.f32 %v197, 0.0
    %v223 = vld [vmem:[#allocation7] sm:$0xff]
    %v224 = vld [vmem:[#allocation7 + $0x8] sm:$0xff]
    %v225 = vld [vmem:[#allocation7 + $0x10] sm:$0xff]
    %v226 = vld [vmem:[#allocation7 + $0x18] sm:$0xff]
    %v227 = vld [vmem:[#allocation7 + $0x20] sm:$0xff]
    %v228 = vld [vmem:[#allocation7 + $0x28] sm:$0xff]
    %v229 = vld [vmem:[#allocation7 + $0x30] sm:$0xff]
    %v230 = vld [vmem:[#allocation7 + $0x38] sm:$0xff]
    %v231 = vld [vmem:[#allocation7 + $0x40] sm:$0xff]
    %v232 = vld [vmem:[#allocation7 + $0x48] sm:$0xff]
    %v233 = vld [vmem:[#allocation7 + $0x50] sm:$0xff]
    %v234 = vld [vmem:[#allocation7 + $0x58] sm:$0xff]
    %v235 = vld [vmem:[#allocation7 + $0x60] sm:$0xff]
    %v236 = vld [vmem:[#allocation7 + $0x68] sm:$0xff]
    %v237 = vld [vmem:[#allocation7 + $0x70] sm:$0xff]
    %v238 = vld [vmem:[#allocation7 + $0x78] sm:$0xff]
    %v239 = vld [vmem:[#allocation7 + $0x80] sm:$0xff]
    %v240 = vld [vmem:[#allocation7 + $0x88] sm:$0xff]
    %v241 = vld [vmem:[#allocation7 + $0x90] sm:$0xff]
    %v242 = vld [vmem:[#allocation7 + $0x98] sm:$0xff]
    %v243 = vld [vmem:[#allocation7 + $0xa0] sm:$0xff]
    %v244 = vld [vmem:[#allocation7 + $0xa8] sm:$0xff]
    %v245 = vld [vmem:[#allocation7 + $0xb0] sm:$0xff]
    %v246 = vld [vmem:[#allocation7 + $0xb8] sm:$0xff]
    %v247 = vld [vmem:[#allocation7 + $0xc0] sm:$0xff]
    %v248 = vld [vmem:[#allocation7 + $0xc8] sm:$0xff]
    %v249 = vld [vmem:[#allocation7 + $0xd0] sm:$0xff]
    %v250 = vld [vmem:[#allocation7 + $0xd8] sm:$0xff]
    %v251 = vld [vmem:[#allocation7 + $0xe0] sm:$0xff]
    %v252 = vld [vmem:[#allocation7 + $0xe8] sm:$0xff]
    %v253 = vld [vmem:[#allocation7 + $0xf0] sm:$0xff]
    %v254 = vld [vmem:[#allocation7 + $0xf8] sm:$0xff]
    %v255 = vld [vmem:[#allocation7 + $0x100] sm:$0xff]
    %v256 = vld [vmem:[#allocation7 + $0x108] sm:$0xff]
    %v257 = vld [vmem:[#allocation7 + $0x110] sm:$0xff]
    %v258 = vld [vmem:[#allocation7 + $0x118] sm:$0xff]
    %v259 = vld [vmem:[#allocation7 + $0x120] sm:$0xff]
    %v260 = vld [vmem:[#allocation7 + $0x128] sm:$0xff]
    %v261 = vld [vmem:[#allocation7 + $0x130] sm:$0xff]
    %v262 = vld [vmem:[#allocation7 + $0x138] sm:$0xff]
    %v263 = vld [vmem:[#allocation7 + $0x140] sm:$0xff]
    %v264 = vld [vmem:[#allocation7 + $0x148] sm:$0xff]
    %v265 = vld [vmem:[#allocation7 + $0x150] sm:$0xff]
    %v266 = vld [vmem:[#allocation7 + $0x158] sm:$0xff]
    %v267 = vld [vmem:[#allocation7 + $0x160] sm:$0xff]
    %v268 = vld [vmem:[#allocation7 + $0x168] sm:$0xff]
    %v269 = vld [vmem:[#allocation7 + $0x170] sm:$0xff]
    %v270 = vld [vmem:[#allocation7 + $0x178] sm:$0xff]
    %v271 = vld [vmem:[#allocation7 + $0x180] sm:$0xff]
    %v272 = vld [vmem:[#allocation7 + $0x188] sm:$0xff]
    %v273 = vld [vmem:[#allocation7 + $0x190] sm:$0xff]
    %v274 = vld [vmem:[#allocation7 + $0x198] sm:$0xff]
    %v275 = vld [vmem:[#allocation7 + $0x1a0] sm:$0xff]
    %v276 = vld [vmem:[#allocation7 + $0x1a8] sm:$0xff]
    %v277 = vld [vmem:[#allocation7 + $0x1b0] sm:$0xff]
    %v278 = vld [vmem:[#allocation7 + $0x1b8] sm:$0xff]
    %v279 = vld [vmem:[#allocation7 + $0x1c0] sm:$0xff]
    %v280 = vld [vmem:[#allocation7 + $0x1c8] sm:$0xff]
    %v281 = vld [vmem:[#allocation7 + $0x1d0] sm:$0xff]
    %v282 = vld [vmem:[#allocation7 + $0x1d8] sm:$0xff]
    %v283 = vld [vmem:[#allocation7 + $0x1e0] sm:$0xff]
    %v284 = vld [vmem:[#allocation7 + $0x1e8] sm:$0xff]
    %v285 = vld [vmem:[#allocation7 + $0x1f0] sm:$0xff]
    %v286 = vld [vmem:[#allocation7 + $0x1f8] sm:$0xff]
    %v287 = vld [vmem:[%s3] sm:$0x1]
    %v289 = vperm.slane %v287, 0
    %291 = vmatpush.msra.mxu0 %v238
    %292 = vmatpush.msra.mxu0 %v237
    %293 = vmatpush.msra.mxu0 %v236
    %294 = vmatpush.msra.mxu0 %v235
    %295 = vmatpush.msra.mxu0 %v234
    %296 = vmatpush.msra.mxu0 %v233
    %297 = vmatpush.msra.mxu0 %v232
    %298 = vmatpush.msra.mxu0 %v231
    %299 = vmatpush.msra.mxu0 %v230
    %300 = vmatpush.msra.mxu0 %v229
    %301 = vmatpush.msra.mxu0 %v228
    %302 = vmatpush.msra.mxu0 %v227
    %303 = vmatpush.msra.mxu0 %v226
    %304 = vmatpush.msra.mxu0 %v225
    %305 = vmatpush.msra.mxu0 %v224
    %306 = vmatpush.msra.mxu0 %v223
    %307 = vmatmul.f32.gmra.mxu0 %v219
    %v308 = vpop.f32.mrf.mxu0
    %v309 = vadd.f32 %v289, %v308
    %310 = vdwg.mxu0
    %311 = vmatpush.msra.mxu0 %v254
    %312 = vmatpush.msra.mxu0 %v253
    %313 = vmatpush.msra.mxu0 %v252
    %314 = vmatpush.msra.mxu0 %v251
    %315 = vmatpush.msra.mxu0 %v250
    %316 = vmatpush.msra.mxu0 %v249
    %317 = vmatpush.msra.mxu0 %v248
    %318 = vmatpush.msra.mxu0 %v247
    %319 = vmatpush.msra.mxu0 %v246
    %320 = vmatpush.msra.mxu0 %v245
    %321 = vmatpush.msra.mxu0 %v244
    %322 = vmatpush.msra.mxu0 %v243
    %323 = vmatpush.msra.mxu0 %v242
    %324 = vmatpush.msra.mxu0 %v241
    %325 = vmatpush.msra.mxu0 %v240
    %326 = vmatpush.msra.mxu0 %v239
    %327 = vmatmul.f32.gmra.mxu0 %v220
    %v328 = vpop.f32.mrf.mxu0
    %v329 = vadd.f32 %v309, %v328
    %330 = vdwg.mxu0
    %331 = vmatpush.msra.mxu0 %v270
    %332 = vmatpush.msra.mxu0 %v269
    %333 = vmatpush.msra.mxu0 %v268
    %334 = vmatpush.msra.mxu0 %v267
    %335 = vmatpush.msra.mxu0 %v266
    %336 = vmatpush.msra.mxu0 %v265
    %337 = vmatpush.msra.mxu0 %v264
    %338 = vmatpush.msra.mxu0 %v263
    %339 = vmatpush.msra.mxu0 %v262
    %340 = vmatpush.msra.mxu0 %v261
    %341 = vmatpush.msra.mxu0 %v260
    %342 = vmatpush.msra.mxu0 %v259
    %343 = vmatpush.msra.mxu0 %v258
    %344 = vmatpush.msra.mxu0 %v257
    %345 = vmatpush.msra.mxu0 %v256
    %346 = vmatpush.msra.mxu0 %v255
    %347 = vmatmul.f32.gmra.mxu0 %v221
    %v348 = vpop.f32.mrf.mxu0
    %v349 = vadd.f32 %v329, %v348
    %350 = vdwg.mxu0
    %351 = vmatpush.msra.mxu0 %v286
    %352 = vmatpush.msra.mxu0 %v285
    %353 = vmatpush.msra.mxu0 %v284
    %354 = vmatpush.msra.mxu0 %v283
    %355 = vmatpush.msra.mxu0 %v282
    %356 = vmatpush.msra.mxu0 %v281
    %357 = vmatpush.msra.mxu0 %v280
    %358 = vmatpush.msra.mxu0 %v279
    %359 = vmatpush.msra.mxu0 %v278
    %360 = vmatpush.msra.mxu0 %v277
    %361 = vmatpush.msra.mxu0 %v276
    %362 = vmatpush.msra.mxu0 %v275
    %363 = vmatpush.msra.mxu0 %v274
    %364 = vmatpush.msra.mxu0 %v273
    %365 = vmatpush.msra.mxu0 %v272
    %366 = vmatpush.msra.mxu0 %v271
    %367 = vmatmul.f32.gmra.mxu0 %v222
    %v368 = vpop.f32.mrf.mxu0
    %v369 = vadd.f32 %v349, %v368
    %370 = vdwg.mxu0
    %v371 = vtanh.pop %v369
    %v372 = vadd.f32 %v371, %v217
    %373 = vst [vmem:[#allocation8] sm:$0xff] %v372
    // Predicated region
    $region30: #{tpu_custom_call.1} parent=1 // pred_check
      _
    $region31: #{tpu_custom_call.1} parent=1 // pred_check_branch
      %375 = sbr.rel (0) target = $region33
    $region32: #{tpu_custom_call.1} parent=1 // pred_region
      %377 = vsyncadd [#allocation4], 0
      %s379 = sshll.u32 [#allocation8], 4
      %s380 = int_to_ptr.vmem [resolvable:$true] %s379
      %s381 = sshll.u32 %s4, 4
      %s382 = int_to_ptr.hbm [resolvable:$true] %s381
      %384 = dma.vmem_to_hbm [thread:$0]  %s380, 128, %s382, [#allocation4]
    $region33: #{tpu_custom_call.1} parent=1 // pred_fallthru
      _
    // Predicated region
    $region34: #{tpu_custom_call.1} parent=1 // pred_check
      _
    $region35: #{tpu_custom_call.1} parent=1 // pred_check_branch
      %386 = sbr.rel (0) target = $region37
    $region36: #{tpu_custom_call.1} parent=1 // pred_region
      %388 = dma.done [#allocation4], 128
    $region37: #{tpu_custom_call.1} parent=1 // pred_fallthru
      _
    %389 = vsyncpa [#allocation3], 1
    %390 = vsyncpa [#allocation6], 1
    %391 = vsyncpa [#allocation4], 1

</llo_original>
